<compile_context>
chip_gen: v5e
topology: v5e:2x2
jax: 0.10.0
libtpu: 0.0.40
codegen_flags: <defaults>
</compile_context>

<pallas_src>
import jax
import jax.numpy as jnp
from jax.experimental import pallas as pl
from jax.experimental.pallas import tpu as pltpu


def _sse_kernel(x_ref, wc_ref, bs_ref, o_ref):
    """Spatial squeeze-and-excite for one (C, TILE_HW) tile.

    x_ref : (C, T) input tile (channels on sublanes, spatial on lanes).
    wc_ref: (C, 1) 1x1-conv weight as a column vector (VMEM, resident).
    bs_ref: (1,)   1x1-conv bias (SMEM scalar).
    o_ref : (C, T) output tile (same dtype as input).
    """
    xf = x_ref[...].astype(jnp.float32)                                   # (C, T)
    # 1x1 conv C -> 1 as VPU broadcast-multiply + sublane (XLU) reduce.
    conv = jnp.sum(xf * wc_ref[...], axis=0, keepdims=True) + bs_ref[0]   # (1, T)
    gate = jax.nn.sigmoid(conv)                                           # (1, T)
    o_ref[...] = (xf * gate).astype(o_ref.dtype)                          # (C, T)


def _round_up(x, m):
    return (x + m - 1) // m * m


def spatial_se(x_nchw, conv_weight, conv_bias, weights=None, *,
               max_tile_hw=2048, vmem_tile_budget_bytes=8 * 1024 * 1024):
    """SpatialSELayer forward.

    x_nchw     : (B, C, H, W), any float dtype (dtype preserved; gate math in f32).
    conv_weight: (C,)  -- nn.Conv2d(C, 1, 1).weight reshaped to (C,)
    conv_bias  : (1,)  -- nn.Conv2d(C, 1, 1).bias
    weights    : optional (C,) alternative weights (PyTorch `weights` arg path; no bias).
    """
    B, C, H, W = x_nchw.shape
    HW = H * W
    dtype = x_nchw.dtype
    itemsize = jnp.dtype(dtype).itemsize

    if weights is not None:
        wc = jnp.asarray(weights, jnp.float32).reshape(C)
        bs = jnp.zeros((1,), jnp.float32)      # F.conv2d(input, weights) path has no bias
    else:
        wc = jnp.asarray(conv_weight, jnp.float32).reshape(C)
        bs = jnp.asarray(conv_bias, jnp.float32).reshape(1)

    # Lane-dense tile: multiple of 128, capped by a conservative VMEM budget
    # (double-buffered input + output tiles of (C, TILE) each must fit).
    hw128 = _round_up(HW, 128)
    max_by_vmem = max(128, (vmem_tile_budget_bytes // (4 * C * max(itemsize, 4))) // 128 * 128)
    tile_hw = min(hw128, max_tile_hw, max_by_vmem)
    hw_pad = _round_up(HW, tile_hw)
    n_tiles = hw_pad // tile_hw

    x = x_nchw.reshape(B, C, HW)
    if hw_pad != HW:
        # Zero padding is benign: padded outputs are sigmoid(bias) * 0 = 0 and cropped below.
        x = jnp.pad(x, ((0, 0), (0, 0), (0, hw_pad - HW)))

    wc_col = wc.reshape(C, 1)

    cost = pl.CostEstimate(
        flops=3 * B * C * hw_pad,            # conv mul+add over C, plus the gating multiply
        transcendentals=B * hw_pad,          # sigmoid per spatial position
        bytes_accessed=2 * B * C * hw_pad * itemsize,
    )

    out = pl.pallas_call(
        _sse_kernel,
        out_shape=jax.ShapeDtypeStruct((B, C, hw_pad), dtype),
        grid_spec=pltpu.PrefetchScalarGridSpec(
            num_scalar_prefetch=0,
            grid=(B, n_tiles),
            in_specs=[
                pl.BlockSpec((pl.Squeezed(), C, tile_hw), lambda b, t: (b, 0, t)),  # x tile
                pl.BlockSpec((C, 1), lambda b, t: (0, 0)),                          # conv weight
                pl.BlockSpec(memory_space=pltpu.MemorySpace.SMEM),                  # conv bias
            ],
            out_specs=pl.BlockSpec((pl.Squeezed(), C, tile_hw), lambda b, t: (b, 0, t)),
        ),
        compiler_params=pltpu.CompilerParams(
            dimension_semantics=("parallel", "parallel"),
            vmem_limit_bytes=32 * 1024 * 1024,
        ),
        cost_estimate=cost,
    )(x, wc_col, bs)

    return out[:, :, :HW].reshape(B, C, H, W)


if __name__ == "__main__":
    key = jax.random.PRNGKey(0)

    def reference(x, wc, bs):
        xf = x.astype(jnp.float32)
        conv = jnp.einsum("bchw,c->bhw", xf, wc) + bs[0]      # 1x1 conv C -> 1
        gate = jax.nn.sigmoid(conv)[:, None, :, :]
        return (xf * gate).astype(x.dtype)

    ok = True
    # Two shapes: one lane-aligned (16x16) and one requiring padding (7x7).
    for (B, C, H, W) in [(2, 8, 16, 16), (2, 8, 7, 7)]:
        k0, k1, k2, key = jax.random.split(key, 4)
        x = jax.random.normal(k0, (B, C, H, W), jnp.float32)
        wc = jax.random.normal(k1, (C,), jnp.float32) * 0.1   # Conv2d(C, 1, 1).weight
        bs = jax.random.normal(k2, (1,), jnp.float32) * 0.1   # Conv2d(C, 1, 1).bias

        out = jax.block_until_ready(spatial_se(x, wc, bs))
        ref = reference(x, wc, bs)
        ok &= bool(jnp.allclose(out, ref, atol=1e-5, rtol=1e-5))

    # Alternate `weights` path of the PyTorch forward (conv with given weights, no bias).
    out_w = jax.block_until_ready(spatial_se(x, wc, bs, weights=wc * 2.0))
    ref_w = reference(x, wc * 2.0, jnp.zeros((1,), jnp.float32))
    ok &= bool(jnp.allclose(out_w, ref_w, atol=1e-5, rtol=1e-5))

    assert ok, "mismatch vs reference"
    print("KERNEL_OK")
</pallas_src>

<mosaic_0001>
module attributes {stable_mosaic.version = 11 : i64} {
  func.func @_sse_kernel(%arg0: i32, %arg1: i32, %arg2: memref<1x8x256xf32, #tpu.memory_space<vmem>>, %arg3: memref<8x1xf32, #tpu.memory_space<vmem>>, %arg4: memref<1xf32, #tpu.memory_space<smem>>, %arg5: memref<1x8x256xf32, #tpu.memory_space<vmem>>) attributes {dimension_semantics = [#tpu.dimension_semantics<parallel>, #tpu.dimension_semantics<parallel>], iteration_bounds = array<i64: 2, 1>, scalar_prefetch = 0 : i64, scratch_operands = 0 : i64, tpu.core_type = #tpu.core_type<tc>, window_params = [{transform_indices = @transform_0, window_bounds = array<i64: 1, 8, 256>}, {pipeline_mode = #tpu.pipeline_mode<synchronous>, transform_indices = @transform_1, window_bounds = array<i64: 8, 1>}, {transform_indices = @transform_2, window_bounds = array<i64: 1>}, {transform_indices = @transform_3, window_bounds = array<i64: 1, 8, 256>}]} {
    %c0 = arith.constant 0 : index
    %c0_0 = arith.constant 0 : index
    %c0_1 = arith.constant 0 : index
    %0 = vector.load %arg2[%c0, %c0_0, %c0_1] : memref<1x8x256xf32, #tpu.memory_space<vmem>>, vector<1x8x256xf32>
    %1 = vector.shape_cast %0 : vector<1x8x256xf32> to vector<8x256xf32>
    %c0_2 = arith.constant 0 : index
    %c0_3 = arith.constant 0 : index
    %2 = vector.load %arg3[%c0_2, %c0_3] : memref<8x1xf32, #tpu.memory_space<vmem>>, vector<8x1xf32>
    %3 = vector.broadcast %2 : vector<8x1xf32> to vector<8x256xf32>
    %4 = arith.mulf %1, %3 : vector<8x256xf32>
    %cst = arith.constant dense<0.000000e+00> : vector<256xf32>
    %5 = vector.multi_reduction <add>, %4, %cst [0] : vector<8x256xf32> to vector<256xf32>
    %6 = vector.shape_cast %5 : vector<256xf32> to vector<1x256xf32>
    %c0_4 = arith.constant 0 : index
    %7 = memref.load %arg4[%c0_4] : memref<1xf32, #tpu.memory_space<smem>>
    %8 = vector.broadcast %7 : f32 to vector<1x256xf32>
    %9 = arith.addf %6, %8 : vector<1x256xf32>
    %10 = arith.negf %9 : vector<1x256xf32>
    %11 = math.exp %10 : vector<1x256xf32>
    %cst_5 = arith.constant 1.000000e+00 : f32
    %12 = vector.broadcast %cst_5 : f32 to vector<1x256xf32>
    %13 = arith.addf %12, %11 : vector<1x256xf32>
    %14 = arith.divf %12, %13 : vector<1x256xf32>
    %15 = vector.broadcast %14 : vector<1x256xf32> to vector<8x256xf32>
    %16 = arith.mulf %1, %15 : vector<8x256xf32>
    %c0_6 = arith.constant 0 : index
    %c0_7 = arith.constant 0 : index
    %c0_8 = arith.constant 0 : index
    %17 = vector.load %arg5[%c0_6, %c0_7, %c0_8] : memref<1x8x256xf32, #tpu.memory_space<vmem>>, vector<1x8x256xf32>
    %18 = vector.shape_cast %17 : vector<1x8x256xf32> to vector<8x256xf32>
    %19 = vector.shape_cast %16 : vector<8x256xf32> to vector<1x8x256xf32>
    tpu.vector_store %arg5[%c0_6, %c0_7, %c0_8], %19 {strides = array<i32>} : memref<1x8x256xf32, #tpu.memory_space<vmem>>, vector<1x8x256xf32>,
    return
  }
  func.func @transform_0(%arg0: i32, %arg1: i32) -> (i32, i32, i32) {
    %c0_i32 = arith.constant 0 : i32
    %c0_i32_0 = arith.constant 0 : i32
    return %arg0, %c0_i32, %arg1 : i32, i32, i32
  }
  func.func @transform_1(%arg0: i32, %arg1: i32) -> (i32, i32) {
    %c0_i32 = arith.constant 0 : i32
    %c0_i32_0 = arith.constant 0 : i32
    %c0_i32_1 = arith.constant 0 : i32
    return %c0_i32, %c0_i32_0 : i32, i32
  }
  func.func @transform_2(%arg0: i32, %arg1: i32) -> i32 {
    %c0_i32 = arith.constant 0 : i32
    %c0_i32_0 = arith.constant 0 : i32
    return %c0_i32 : i32
  }
  func.func @transform_3(%arg0: i32, %arg1: i32) -> (i32, i32, i32) {
    %c0_i32 = arith.constant 0 : i32
    %c0_i32_0 = arith.constant 0 : i32
    return %arg0, %c0_i32, %arg1 : i32, i32, i32
  }
}

</mosaic_0001>

<llo_original>
// kernel: tpu_custom_call.1
$region0: #{tpu_custom_call.1}
  #allocation0 [shape = 'u32[]', space=smem, size = 0x4, offset = 0x4, fixed_abs, tag = 'smem constant byte address 0x4 - core index']
  #allocation1 [shape = 'u32[72,128]{1,0:T(1,128)}', space=vmem, size = 0x9000, scoped, tag = 'internal scratch']
  #allocation2 [shape = 'f32[1]{0:T(128)S(6)}', space=smem, size = 0x200, scoped, tag = 'scoped memory for tpu_custom_call.1']
  %s0 = inlined_call_operand.hbm [shape: f32[2,8,256], index: 0, kind: input, shape index: {}]
  %s1 = inlined_call_operand.vmem [shape: f32[8,1], index: 1, kind: input, shape index: {}]
  %s2 = inlined_call_operand.<no memory space> [shape: f32[1], index: 2, kind: input, shape index: {}]
  %s3 = inlined_call_operand.hbm [shape: f32[2,8,256], index: 3, kind: output, shape index: {}]
  %s4 = sld [smem:[#allocation0]]
  $region49: #{tpu_custom_call.1} parent=0
    _
  %s6 = ssub.s32 1, %s4
  %s7 = scalar_select 0, %s6, %s4
  %8 = sst [smem:[#allocation2]] %s2
  $region1: #{tpu_custom_call.1} parent=0
    #allocation3 [shape = 'u8[16384]{0}', space=vmem, size = 0x4000, scoped, tag = 'input window, operand 0']
    #allocation4 [shape = 's32[2]{0}', space=sflag, size = 0x8, scoped, tag = 'scoped memory for tpu_custom_call.1']
    #allocation5 [shape = 's32[2]{0}', space=sflag, size = 0x8, scoped, tag = 'scoped memory for tpu_custom_call.1']
    #allocation6 [shape = 'u8[16384]{0}', space=vmem, size = 0x4000, scoped, tag = 'output window, operand 0']
    %9 = vsyncpa [#allocation4], 0
    %s10 = scalar_lea.sflag [#allocation4], 1
    %11 = vsyncpa %s10, 0
    %12 = vsyncpa [#allocation5], 0
    %s13 = scalar_lea.sflag [#allocation5], 1
    %14 = vsyncpa %s13, 0
    loop: start=0, step=1, limit=4
    $region2: #{tpu_custom_call.1} parent=1 // loop_pre_header
      _
    $region3: #{tpu_custom_call.1} parent=1 // loop_header
      %s16 = sphi 0, %s20
      %p17 = scmp.ge.s32.totalorder %s16, 4
      %s23 = sphi 0, %s35
      %s24 = sphi 0, %s31
      %s25 = sphi 0, %s23
      %s26 = sphi 0, %s24
      %s27 = sphi 0, %s25
      %s28 = sphi 0, %s26
      %s40 = sphi 0, %s42
      %s43 = sphi 0, %s40
      %s44 = sphi 0, %s43
      %s60 = sphi 0, %s44
      %s64 = sphi 0, %s64
      %s66 = sphi 0, %s64
      %s67 = sphi 0, %s66
      %s81 = sphi 0, %s67
      %s85 = sphi 0, %s85
      %s87 = sphi 0, %s85
      %s88 = sphi 0, %s87
      %s102 = sphi 0, %s88
      %s110 = sphi 0, %s112
      %s113 = sphi 0, %s110
      %s114 = sphi 0, %s113
      %s130 = sphi 0, %s114
    $region4: #{tpu_custom_call.1} parent=1 // loop_header_branch
      %19 = sbr.rel (%p17) target = $region8
    $region5: #{tpu_custom_call.1} parent=1 // loop_body
      %s21 = ssub.s32 %s16, 1
      %s22 = ssub.s32 %s16, 2
      %s29 = sadd.s32 1, %s24
      %p30 = scmp.ge.s32.totalorder %s29, 1
      %s31 = scalar_select %p30, 0, %s29
      %s32 = sadd.s32 1, %s23
      %s33 = scalar_select %p30, %s32, %s23
      %p34 = scmp.ge.s32.totalorder %s33, 2
      %s35 = scalar_select %p34, 0, %s33
      %s36 = ssub.s32 %s23, %s35
      %s37 = ssub.s32 %s24, %s31
      %s38 = sor.u32 %s36, %s37
      %p39 = scmp.eq.s32.totalorder %s38, 0
      %s41 = sadd.s32 %s40, 1
      %s42 = scalar_select %p39, %s40, %s41
      %p45 = pneg %p39
      %p46 = scmp.eq.s32.totalorder %s16, 1
      %p47 = por %p45, %p46
      %p48 = scmp.ne.s32.totalorder %s40, %s43
      %p49 = scmp.eq.s32.totalorder %s16, 0
      %p50 = por %p48, %p49
      %p51 = scmp.ne.s32.totalorder %s40, %s43
      %p52 = scmp.eq.s32.totalorder %s21, 1
      %p53 = por %p51, %p52
      %p54 = scmp.ne.s32.totalorder %s43, %s44
      %p55 = scmp.eq.s32.totalorder %s21, 0
      %p56 = por %p54, %p55
      %p57 = scmp.ne.s32.totalorder %s43, %s44
      %p58 = scmp.eq.s32.totalorder %s22, 1
      %p59 = por %p57, %p58
      %p61 = scmp.ne.s32.totalorder %s44, %s60
      %p62 = scmp.eq.s32.totalorder %s22, 0
      %p63 = por %p61, %p62
      %s65 = sadd.s32 %s64, 1
      %p68 = scmp.eq.s32.totalorder %s16, 1
      %p69 = scmp.ne.s32.totalorder %s64, %s66
      %p70 = scmp.eq.s32.totalorder %s16, 0
      %p71 = por %p69, %p70
      %p72 = scmp.ne.s32.totalorder %s64, %s66
      %p73 = scmp.eq.s32.totalorder %s21, 1
      %p74 = por %p72, %p73
      %p75 = scmp.ne.s32.totalorder %s66, %s67
      %p76 = scmp.eq.s32.totalorder %s21, 0
      %p77 = por %p75, %p76
      %p78 = scmp.ne.s32.totalorder %s66, %s67
      %p79 = scmp.eq.s32.totalorder %s22, 1
      %p80 = por %p78, %p79
      %p82 = scmp.ne.s32.totalorder %s67, %s81
      %p83 = scmp.eq.s32.totalorder %s22, 0
      %p84 = por %p82, %p83
      %s86 = sadd.s32 %s85, 1
      %p89 = scmp.eq.s32.totalorder %s16, 1
      %p90 = scmp.ne.s32.totalorder %s85, %s87
      %p91 = scmp.eq.s32.totalorder %s16, 0
      %p92 = por %p90, %p91
      %p93 = scmp.ne.s32.totalorder %s85, %s87
      %p94 = scmp.eq.s32.totalorder %s21, 1
      %p95 = por %p93, %p94
      %p96 = scmp.ne.s32.totalorder %s87, %s88
      %p97 = scmp.eq.s32.totalorder %s21, 0
      %p98 = por %p96, %p97
      %p99 = scmp.ne.s32.totalorder %s87, %s88
      %p100 = scmp.eq.s32.totalorder %s22, 1
      %p101 = por %p99, %p100
      %p103 = scmp.ne.s32.totalorder %s88, %s102
      %p104 = scmp.eq.s32.totalorder %s22, 0
      %p105 = por %p103, %p104
      %s106 = ssub.s32 %s23, %s35
      %s107 = ssub.s32 %s24, %s31
      %s108 = sor.u32 %s106, %s107
      %p109 = scmp.eq.s32.totalorder %s108, 0
      %s111 = sadd.s32 %s110, 1
      %s112 = scalar_select %p109, %s110, %s111
      %p115 = pneg %p109
      %p116 = scmp.eq.s32.totalorder %s16, 1
      %p117 = por %p115, %p116
      %p118 = scmp.ne.s32.totalorder %s110, %s113
      %p119 = scmp.eq.s32.totalorder %s16, 0
      %p120 = por %p118, %p119
      %p121 = scmp.ne.s32.totalorder %s110, %s113
      %p122 = scmp.eq.s32.totalorder %s21, 1
      %p123 = por %p121, %p122
      %p124 = scmp.ne.s32.totalorder %s113, %s114
      %p125 = scmp.eq.s32.totalorder %s21, 0
      %p126 = por %p124, %p125
      %p127 = scmp.ne.s32.totalorder %s113, %s114
      %p128 = scmp.eq.s32.totalorder %s22, 1
      %p129 = por %p127, %p128
      %p131 = scmp.ne.s32.totalorder %s114, %s130
      %p132 = scmp.eq.s32.totalorder %s22, 0
      %p133 = por %p131, %p132
      %p134 = scmp.le.s32.totalorder 1, %s16
      %p135 = scmp.lt.s32.totalorder %s16, 3
      %p136 = pnand %p134, %p135
      %p137 = pneg %p136
      // Predicated region
      $region9: #{tpu_custom_call.1} parent=5 // pred_check
        _
      $region10: #{tpu_custom_call.1} parent=5 // pred_check_branch
        %139 = sbr.rel (%p136) target = $region12
      $region11: #{tpu_custom_call.1} parent=5 // pred_region
        %s140 = ssub.s32 %s16, 1
        // Predicated region
        $region13: #{tpu_custom_call.1} parent=11 // pred_check
          %p141 = pneg %p77
        $region14: #{tpu_custom_call.1} parent=11 // pred_check_branch
          %143 = sbr.rel (%p141) target = $region16
        $region15: #{tpu_custom_call.1} parent=11 // pred_region
          _
        $region16: #{tpu_custom_call.1} parent=11 // pred_fallthru
          _
        // Predicated region
        $region17: #{tpu_custom_call.1} parent=11 // pred_check
          %p144 = pneg %p98
        $region18: #{tpu_custom_call.1} parent=11 // pred_check_branch
          %146 = sbr.rel (%p144) target = $region20
        $region19: #{tpu_custom_call.1} parent=11 // pred_region
          _
        $region20: #{tpu_custom_call.1} parent=11 // pred_fallthru
          _
      $region12: #{tpu_custom_call.1} parent=5 // pred_fallthru
        _
      %p147 = scmp.lt.s32.totalorder %s16, 2
      // Predicated region
      $region21: #{tpu_custom_call.1} parent=5 // pred_check
        %p148 = pneg %p147
      $region22: #{tpu_custom_call.1} parent=5 // pred_check_branch
        %150 = sbr.rel (%p148) target = $region24
      $region23: #{tpu_custom_call.1} parent=5 // pred_region
        // Predicated region
        $region25: #{tpu_custom_call.1} parent=23 // pred_check
          %p151 = pneg %p50
        $region26: #{tpu_custom_call.1} parent=23 // pred_check_branch
          %153 = sbr.rel (%p151) target = $region28
        $region27: #{tpu_custom_call.1} parent=23 // pred_region
          %s154 = sand.u32 %s40, 1
          %s155 = scalar_lea.sflag [#allocation4], %s154
          %s156 = sand.u32 %s40, 1
          %s157 = smul.addr %s156, 16
          %s158 = scalar_lea.vmem [#allocation3], %s157
          %s159 = smul.u32 2, %s24
          %161 = vsyncadd %s155, 0
          %s162 = smul.addr %s23, 2
          %s163 = sadd.s32 %s159, %s162
          %s164 = smul.addr %s163, 8
          %s165 = scalar_lea.hbm %s0, %s164
          %s167 = sshll.u32 %s165, 4
          %s168 = int_to_ptr.hbm [resolvable:$true] %s167
          %s169 = sshll.u32 %s158, 4
          %s170 = int_to_ptr.vmem [resolvable:$true] %s169
          %172 = dma.hbm_to_vmem [thread:$0]  %s168, 256, %s170, %s155
        $region28: #{tpu_custom_call.1} parent=23 // pred_fallthru
          _
      $region24: #{tpu_custom_call.1} parent=5 // pred_fallthru
        _
      %p173 = scmp.le.s32.totalorder 1, %s16
      %p174 = scmp.lt.s32.totalorder %s16, 3
      %p175 = pnand %p173, %p174
      %p176 = pneg %p175
      // Predicated region
      $region29: #{tpu_custom_call.1} parent=5 // pred_check
        _
      $region30: #{tpu_custom_call.1} parent=5 // pred_check_branch
        %178 = sbr.rel (%p175) target = $region32
      $region31: #{tpu_custom_call.1} parent=5 // pred_region
        %s179 = ssub.s32 %s16, 1
        %s180 = sand.u32 %s43, 1
        %s181 = scalar_lea.sflag [#allocation4], %s180
        %s182 = sand.u32 %s43, 1
        %s183 = smul.addr %s182, 16
        %s184 = scalar_lea.vmem [#allocation3], %s183
        // Predicated region
        $region33: #{tpu_custom_call.1} parent=31 // pred_check
          %p185 = pneg %p56
        $region34: #{tpu_custom_call.1} parent=31 // pred_check_branch
          %187 = sbr.rel (%p185) target = $region36
        $region35: #{tpu_custom_call.1} parent=31 // pred_region
          %189 = dma.done %s181, 256
        $region36: #{tpu_custom_call.1} parent=31 // pred_fallthru
          _
        %s190 = sand.u32 %s43, 1
        %s191 = scalar_lea.sflag [#allocation4], %s190
        %s192 = sand.u32 %s43, 1
        %s193 = smul.addr %s192, 16
        %s194 = scalar_lea.vmem [#allocation3], %s193
        %p195 = pneg %p56
        %p196 = pneg %p53
        %p197 = pneg %p77
        %p198 = pneg %p74
        %p199 = pneg %p98
        %p200 = pneg %p95
        %p201 = pneg %p126
        %p202 = pneg %p123
        %s203 = sand.u32 %s113, 1
        %s204 = scalar_lea.sflag [#allocation5], %s203
        %s205 = sand.u32 %s113, 1
        %s206 = smul.addr %s205, 16
        %s207 = scalar_lea.vmem [#allocation6], %s206
        %s208 = smul.u32 2, %s26
        %s209 = smul.u32 2, %s26
        %v210 = vld [vmem:[%s184] sm:$0xff]
        %v211 = vld [vmem:[%s184 + $0x8] sm:$0xff]
        %v212 = vld [vmem:[%s1] sm:$0xff]
        %214 = vset.pattern.permute.xlu0 0
        %215 = vperm.xlu0 %214, %v212
        %v216 = vpop.permute.xlu0 %215
        %v218 = vmul.f32 %v210, %v216
        %v219 = vmul.f32 %v211, %v216
        %v220 = vrot.slane %v218, 4
        %v221 = vadd.f32 %v218, %v220
        %v222 = vrot.slane %v221, 2
        %v223 = vadd.f32 %v221, %v222
        %v224 = vrot.slane %v223, 1
        %v225 = vadd.f32 %v223, %v224
        %v226 = vrot.slane %v219, 4
        %v227 = vadd.f32 %v219, %v226
        %v228 = vrot.slane %v227, 2
        %v229 = vadd.f32 %v227, %v228
        %v230 = vrot.slane %v229, 1
        %v231 = vadd.f32 %v229, %v230
        %s232 = sld [smem:[#allocation2]]
        %v233 = vstv %s232
        %v234 = vadd.f32 %v225, %v233
        %v235 = vadd.f32 %v231, %v233
        %v236 = vxor.u32 %v234, 2147483648
        %v237 = vxor.u32 %v235, 2147483648
        %v238 = vmul.f32 %v236, 1.442695
        %v239 = vpow.pop %v238
        %v240 = vmul.f32 %v237, 1.442695
        %v241 = vpow.pop %v240
        %v242 = vadd.f32 %v239, 1.0
        %v243 = vadd.f32 %v241, 1.0
        %v244 = vrcp.pop %v242
        %v245 = vmul.f32 %v242, %v244
        %v246 = vsub.f32 1.0, %v245
        %v247 = vmul.f32 %v244, %v246
        %v248 = vadd.f32 %v244, %v247
        %vm249 = vweird.f32 %v242
        %vm250 = vweird.f32 %v244
        %vm251 = vmor %vm249, %vm250
        %v252 = vsel %vm251, %v244, %v248
        %v253 = vand.u32 2147483647, %v242
        %vm254 = vcmp.eq.f32.partialorder %v253, 8.507059e+37
        %v255 = vand.u32 %v242, 2147483648
        %v256 = vor.u32 1.1754944e-38, %v255
        %v257 = vsel %vm254, %v256, %v252
        %v258 = vmul.f32 1.0, %v257
        %v259 = vrcp.pop %v243
        %v260 = vmul.f32 %v243, %v259
        %v261 = vsub.f32 1.0, %v260
        %v262 = vmul.f32 %v259, %v261
        %v263 = vadd.f32 %v259, %v262
        %vm264 = vweird.f32 %v243
        %vm265 = vweird.f32 %v259
        %vm266 = vmor %vm264, %vm265
        %v267 = vsel %vm266, %v259, %v263
        %v268 = vand.u32 2147483647, %v243
        %vm269 = vcmp.eq.f32.partialorder %v268, 8.507059e+37
        %v270 = vand.u32 %v243, 2147483648
        %v271 = vor.u32 1.1754944e-38, %v270
        %v272 = vsel %vm269, %v271, %v267
        %v273 = vmul.f32 1.0, %v272
        %v274 = vmul.f32 %v210, %v258
        %v275 = vmul.f32 %v211, %v273
        %276 = vst [vmem:[%s207] sm:$0xff] %v274
        %277 = vst [vmem:[%s207 + $0x8] sm:$0xff] %v275
        %s278 = sand.u32 %s113, 1
        %s279 = scalar_lea.sflag [#allocation5], %s278
        %s280 = sand.u32 %s113, 1
        %s281 = smul.addr %s280, 16
        %s282 = scalar_lea.vmem [#allocation6], %s281
        // Predicated region
        $region37: #{tpu_custom_call.1} parent=31 // pred_check
          %p283 = pneg %p123
        $region38: #{tpu_custom_call.1} parent=31 // pred_check_branch
          %285 = sbr.rel (%p283) target = $region40
        $region39: #{tpu_custom_call.1} parent=31 // pred_region
          %s286 = smul.u32 2, %s26
          %288 = vsyncadd %s279, 0
          %s289 = smul.addr %s25, 2
          %s290 = sadd.s32 %s286, %s289
          %s291 = smul.addr %s290, 8
          %s292 = scalar_lea.hbm %s3, %s291
          %s294 = sshll.u32 %s282, 4
          %s295 = int_to_ptr.vmem [resolvable:$true] %s294
          %s296 = sshll.u32 %s292, 4
          %s297 = int_to_ptr.hbm [resolvable:$true] %s296
          %299 = dma.vmem_to_hbm [thread:$0]  %s295, 256, %s297, %s279
        $region40: #{tpu_custom_call.1} parent=31 // pred_fallthru
          _
      $region32: #{tpu_custom_call.1} parent=5 // pred_fallthru
        _
      %p300 = scmp.le.s32.totalorder 2, %s16
      // Predicated region
      $region41: #{tpu_custom_call.1} parent=5 // pred_check
        %p301 = pneg %p300
      $region42: #{tpu_custom_call.1} parent=5 // pred_check_branch
        %303 = sbr.rel (%p301) target = $region44
      $region43: #{tpu_custom_call.1} parent=5 // pred_region
        %s304 = ssub.s32 %s16, 2
        // Predicated region
        $region45: #{tpu_custom_call.1} parent=43 // pred_check
          %p305 = pneg %p129
        $region46: #{tpu_custom_call.1} parent=43 // pred_check_branch
          %307 = sbr.rel (%p305) target = $region48
        $region47: #{tpu_custom_call.1} parent=43 // pred_region
          %s308 = sand.u32 %s114, 1
          %s309 = scalar_lea.sflag [#allocation5], %s308
          %s310 = sand.u32 %s114, 1
          %s311 = smul.addr %s310, 16
          %s312 = scalar_lea.vmem [#allocation6], %s311
          %314 = dma.done %s309, 256
        $region48: #{tpu_custom_call.1} parent=43 // pred_fallthru
          _
      $region44: #{tpu_custom_call.1} parent=5 // pred_fallthru
        _
    $region6: #{tpu_custom_call.1} parent=1 // loop_footer
      %s20 = sadd.s32 1, %s16
    $region7: #{tpu_custom_call.1} parent=1 // loop_footer_branch
      %15 = sbr.rel target = $region3
    $region8: #{tpu_custom_call.1} parent=1 // loop_exit
      _
    %315 = vsyncpa [#allocation4], 1
    %s316 = scalar_lea.sflag [#allocation4], 1
    %317 = vsyncpa %s316, 1
    %318 = vsyncpa [#allocation5], 1
    %s319 = scalar_lea.sflag [#allocation5], 1
    %320 = vsyncpa %s319, 1

</llo_original>
